<compile_context>
chip_gen: v6e
topology: v6e:2x2x1
jax: 0.10.0
libtpu: 0.0.40
codegen_flags: <defaults>
</compile_context>

<pallas_src>
import functools
import math

import jax
import jax.numpy as jnp
from jax.experimental import pallas as pl
from jax.experimental.pallas import tpu as pltpu


def _varifocal_kernel(pred_ref, gt_ref, out_ref, *, alpha, gamma):
    # Upcast inside the kernel (matches torch autocast(enabled=False) + .float()).
    x = pred_ref[...].astype(jnp.float32)
    y = gt_ref[...].astype(jnp.float32)

    ax = jnp.abs(x)
    s = jax.nn.sigmoid(ax)                      # EUP #1; s in [0.5, 1]
    p = jnp.where(x >= 0.0, s, 1.0 - s)         # sigmoid(x) via VPU select (no extra EUP)

    d = jnp.abs(p - y)
    if gamma == 2.0:                            # static special-case: no pow (exp+log)
        dg = d * d
    else:
        dg = jnp.power(d, gamma)

    # alpha*dg*(y<=0) + y*(y>0)  ==  where(y > 0, y, alpha*dg)   (complementary masks)
    weight = jnp.where(y > 0.0, y, alpha * dg)

    # Stable BCE-with-logits, reduction='none':  log1p(exp(-|x|)) == -log(sigmoid(|x|)).
    bce = jnp.maximum(x, 0.0) - x * y - jnp.log(s)   # EUP #2

    out_ref[...] = (bce * weight).astype(out_ref.dtype)


def _round_up(v, m):
    return -(-v // m) * m


def varifocal_loss(pred_score, gt_score, *, alpha=0.75, gamma=2.0, block_elems=262144):
    """Elementwise varifocal loss (reduction='none'). Returns float32, same shape."""
    assert pred_score.shape == gt_score.shape
    orig_shape = pred_score.shape
    total = int(math.prod(orig_shape)) if orig_shape else 1

    # Sublane multiple: sub-32-bit dtypes pack along sublanes (bf16 -> 16, int8 -> 32).
    itemsizes = [jnp.dtype(pred_score.dtype).itemsize,
                 jnp.dtype(gt_score.dtype).itemsize, 4]
    sub = max(8, 32 // min(itemsizes))

    # Lane-dense layout: widest last dim dividing the element count exactly (no copy).
    lane_w = None
    for cand in (2048, 1024, 512, 256, 128):
        if total % cand == 0:
            lane_w = cand
            break
    if lane_w is None:
        lane_w = 128
        pad = (-total) % lane_w      # rare fallback: minimal pad (one extra HBM pass)
    else:
        pad = 0

    rows = (total + pad) // lane_w

    pred_flat = pred_score.reshape(-1)
    gt_flat = gt_score.reshape(-1)
    if pad:
        pred_flat = jnp.pad(pred_flat, (0, pad))
        gt_flat = jnp.pad(gt_flat, (0, pad))
    pred2d = pred_flat.reshape(rows, lane_w)   # free reshape, native dtype
    gt2d = gt_flat.reshape(rows, lane_w)

    # Row tile: ~block_elems elements (~1 MiB f32) per operand block, rounded to the
    # sublane multiple, shrunk so the "parallel" grid has >= 2 steps (megacore split).
    if rows <= sub:
        tile_r = rows                                   # single full-extent block
    else:
        tile_r = max(sub, (block_elems // lane_w) // sub * sub)
        half_rows = _round_up(pl.cdiv(rows, 2), sub)
        tile_r = max(sub, min(tile_r, half_rows))
    grid = pl.cdiv(rows, tile_r)                        # last block may be partial

    kernel = functools.partial(
        _varifocal_kernel, alpha=float(alpha), gamma=float(gamma)
    )

    n_elem = rows * lane_w
    bytes_in = (pred2d.size * pred2d.dtype.itemsize
                + gt2d.size * gt2d.dtype.itemsize)
    bytes_out = n_elem * 4

    out = pl.pallas_call(
        kernel,
        out_shape=jax.ShapeDtypeStruct((rows, lane_w), jnp.float32),
        grid=(grid,),
        in_specs=[
            pl.BlockSpec((tile_r, lane_w), lambda i: (i, 0)),
            pl.BlockSpec((tile_r, lane_w), lambda i: (i, 0)),
        ],
        out_specs=pl.BlockSpec((tile_r, lane_w), lambda i: (i, 0)),
        compiler_params=pltpu.CompilerParams(
            dimension_semantics=("parallel",),   # purely elementwise -> megacore-splittable
        ),
        cost_estimate=pl.CostEstimate(
            flops=12 * n_elem,
            transcendentals=2 * n_elem,
            bytes_accessed=bytes_in + bytes_out,
        ),
    )(pred2d, gt2d)

    if pad:
        return out.reshape(-1)[:total].reshape(orig_shape)
    return out.reshape(orig_shape)               # free reshape, no copy


def _varifocal_ref(pred_score, gt_score, *, alpha=0.75, gamma=2.0):
    x = pred_score.astype(jnp.float32)
    y = gt_score.astype(jnp.float32)
    weight = (alpha * jnp.abs(jax.nn.sigmoid(x) - y) ** gamma
              * (y <= 0.0).astype(jnp.float32)
              + y * (y > 0.0).astype(jnp.float32))
    bce = jnp.maximum(x, 0.0) - x * y + jnp.log1p(jnp.exp(-jnp.abs(x)))
    return bce * weight


if __name__ == "__main__":
    key = jax.random.PRNGKey(0)
    k1, k2, k3 = jax.random.split(key, 3)

    # Small YOLO-like shapes: (batch, anchors, num_classes). 2*100*16 = 3200 elems,
    # a multiple of 128 (no-pad fast path) but not of the row tile (partial last block).
    B, A, C = 2, 100, 16
    pred_score = jax.random.normal(k1, (B, A, C), dtype=jnp.float32) * 3.0
    # gt_score: IoU-style targets in [0, 1], mostly zero (background).
    iou = jax.random.uniform(k2, (B, A, C), dtype=jnp.float32)
    fg = (jax.random.uniform(k3, (B, A, C)) < 0.25).astype(jnp.float32)
    gt_score = iou * fg

    loss = varifocal_loss(pred_score, gt_score, alpha=0.75, gamma=2.0)
    jax.block_until_ready(loss)

    ref = _varifocal_ref(pred_score, gt_score, alpha=0.75, gamma=2.0)
    assert loss.shape == ref.shape, (loss.shape, ref.shape)
    assert jnp.allclose(loss, ref, atol=2e-5, rtol=2e-5), (
        float(jnp.max(jnp.abs(loss - ref)))
    )

    print("KERNEL_OK")
</pallas_src>

<mosaic_0001>
module attributes {stable_mosaic.version = 11 : i64} {
  func.func @_varifocal_kernel(%arg0: i32, %arg1: memref<16x128xf32, #tpu.memory_space<vmem>>, %arg2: memref<16x128xf32, #tpu.memory_space<vmem>>, %arg3: memref<16x128xf32, #tpu.memory_space<vmem>>) attributes {dimension_semantics = [#tpu.dimension_semantics<parallel>], iteration_bounds = array<i64: 2>, scalar_prefetch = 0 : i64, scratch_operands = 0 : i64, tpu.core_type = #tpu.core_type<tc>, window_params = [{transform_indices = @transform_0, window_bounds = array<i64: 16, 128>}, {transform_indices = @transform_1, window_bounds = array<i64: 16, 128>}, {transform_indices = @transform_2, window_bounds = array<i64: 16, 128>}]} {
    %c0 = arith.constant 0 : index
    %c0_0 = arith.constant 0 : index
    %0 = vector.load %arg1[%c0, %c0_0] : memref<16x128xf32, #tpu.memory_space<vmem>>, vector<16x128xf32>
    %c0_1 = arith.constant 0 : index
    %c0_2 = arith.constant 0 : index
    %1 = vector.load %arg2[%c0_1, %c0_2] : memref<16x128xf32, #tpu.memory_space<vmem>>, vector<16x128xf32>
    %2 = math.absf %0 : vector<16x128xf32>
    %3 = arith.negf %2 : vector<16x128xf32>
    %4 = math.exp %3 : vector<16x128xf32>
    %cst = arith.constant 1.000000e+00 : f32
    %5 = vector.broadcast %cst : f32 to vector<16x128xf32>
    %6 = arith.addf %5, %4 : vector<16x128xf32>
    %7 = arith.divf %5, %6 : vector<16x128xf32>
    %cst_3 = arith.constant 0.000000e+00 : f32
    %8 = vector.broadcast %cst_3 : f32 to vector<16x128xf32>
    %9 = arith.cmpf oge, %0, %8 : vector<16x128xf32>
    %cst_4 = arith.constant 1.000000e+00 : f32
    %10 = vector.broadcast %cst_4 : f32 to vector<16x128xf32>
    %11 = arith.subf %10, %7 : vector<16x128xf32>
    %12 = arith.select %9, %7, %11 : vector<16x128xi1>, vector<16x128xf32>
    %13 = arith.subf %12, %1 : vector<16x128xf32>
    %14 = math.absf %13 : vector<16x128xf32>
    %15 = arith.mulf %14, %14 : vector<16x128xf32>
    %cst_5 = arith.constant 0.000000e+00 : f32
    %16 = vector.broadcast %cst_5 : f32 to vector<16x128xf32>
    %17 = arith.cmpf ogt, %1, %16 : vector<16x128xf32>
    %cst_6 = arith.constant 7.500000e-01 : f32
    %18 = vector.broadcast %cst_6 : f32 to vector<16x128xf32>
    %19 = arith.mulf %18, %15 : vector<16x128xf32>
    %20 = arith.select %17, %1, %19 : vector<16x128xi1>, vector<16x128xf32>
    %cst_7 = arith.constant 0.000000e+00 : f32
    %21 = vector.broadcast %cst_7 : f32 to vector<16x128xf32>
    %22 = arith.maximumf %0, %21 : vector<16x128xf32>
    %23 = arith.mulf %0, %1 : vector<16x128xf32>
    %24 = arith.subf %22, %23 : vector<16x128xf32>
    %25 = math.log %7 : vector<16x128xf32>
    %26 = arith.subf %24, %25 : vector<16x128xf32>
    %27 = arith.mulf %26, %20 : vector<16x128xf32>
    %c0_8 = arith.constant 0 : index
    %c0_9 = arith.constant 0 : index
    %28 = vector.load %arg3[%c0_8, %c0_9] : memref<16x128xf32, #tpu.memory_space<vmem>>, vector<16x128xf32>
    tpu.vector_store %arg3[%c0_8, %c0_9], %27 {strides = array<i32>} : memref<16x128xf32, #tpu.memory_space<vmem>>, vector<16x128xf32>,
    return
  }
  func.func @transform_0(%arg0: i32) -> (i32, i32) {
    %c0_i32 = arith.constant 0 : i32
    %c0_i32_0 = arith.constant 0 : i32
    return %arg0, %c0_i32 : i32, i32
  }
  func.func @transform_1(%arg0: i32) -> (i32, i32) {
    %c0_i32 = arith.constant 0 : i32
    %c0_i32_0 = arith.constant 0 : i32
    return %arg0, %c0_i32 : i32, i32
  }
  func.func @transform_2(%arg0: i32) -> (i32, i32) {
    %c0_i32 = arith.constant 0 : i32
    %c0_i32_0 = arith.constant 0 : i32
    return %arg0, %c0_i32 : i32, i32
  }
}

</mosaic_0001>

<llo_original>
// kernel: tpu_custom_call.1
$region0: #{tpu_custom_call.1}
  #allocation0 [shape = 'u32[]', space=smem, size = 0x4, offset = 0x4, fixed_abs, tag = 'smem constant byte address 0x4 - core index']
  #allocation1 [shape = 'u32[144,128]{1,0:T(1,128)}', space=vmem, size = 0x12000, scoped, tag = 'internal scratch']
  %s0 = inlined_call_operand.hbm [shape: f32[25,128], index: 0, kind: input, shape index: {}]
  %s1 = inlined_call_operand.hbm [shape: f32[25,128], index: 1, kind: input, shape index: {}]
  %s2 = inlined_call_operand.hbm [shape: f32[25,128], index: 2, kind: output, shape index: {}]
  %s3 = sld [smem:[#allocation0]]
  $region49: #{tpu_custom_call.1} parent=0
    _
  %s5 = ssub.s32 1, %s3
  %s6 = scalar_select 0, %s5, %s3
  $region1: #{tpu_custom_call.1} parent=0
    #allocation2 [shape = 'u8[16384]{0}', space=vmem, size = 0x4000, scoped, tag = 'input window, operand 0']
    #allocation3 [shape = 's32[2]{0}', space=sflag, size = 0x8, scoped, tag = 'scoped memory for tpu_custom_call.1']
    #allocation4 [shape = 's32[2]{0}', space=sflag, size = 0x8, scoped, tag = 'scoped memory for tpu_custom_call.1']
    #allocation5 [shape = 'u8[16384]{0}', space=vmem, size = 0x4000, scoped, tag = 'input window, operand 1']
    #allocation6 [shape = 's32[2]{0}', space=sflag, size = 0x8, scoped, tag = 'scoped memory for tpu_custom_call.1']
    #allocation7 [shape = 'u8[16384]{0}', space=vmem, size = 0x4000, scoped, tag = 'output window, operand 0']
    %7 = vsyncpa [#allocation3], 0
    %s8 = scalar_lea.sflag [#allocation3], 1
    %9 = vsyncpa %s8, 0
    %10 = vsyncpa [#allocation6], 0
    %s11 = scalar_lea.sflag [#allocation6], 1
    %12 = vsyncpa %s11, 0
    %13 = vsyncpa [#allocation4], 0
    %s14 = scalar_lea.sflag [#allocation4], 1
    %15 = vsyncpa %s14, 0
    loop: start=0, step=1, limit=4
    $region2: #{tpu_custom_call.1} parent=1 // loop_pre_header
      _
    $region3: #{tpu_custom_call.1} parent=1 // loop_header
      %s17 = sphi 0, %s21
      %p18 = scmp.ge.s32.totalorder %s17, 4
      %s27 = sphi 0, %s29
      %s30 = sphi 0, %s27
      %s31 = sphi 0, %s30
      %s47 = sphi 0, %s31
      %s53 = sphi 0, %s55
      %s56 = sphi 0, %s53
      %s57 = sphi 0, %s56
      %s73 = sphi 0, %s57
      %s79 = sphi 0, %s81
      %s82 = sphi 0, %s79
      %s83 = sphi 0, %s82
      %s99 = sphi 0, %s83
    $region4: #{tpu_custom_call.1} parent=1 // loop_header_branch
      %20 = sbr.rel (%p18) target = $region8
    $region5: #{tpu_custom_call.1} parent=1 // loop_body
      %s22 = ssub.s32 %s17, 1
      %s23 = ssub.s32 %s17, 2
      %s24 = sadd.s32 %s17, 1
      %s25 = ssub.s32 %s17, %s24
      %p26 = scmp.eq.s32.totalorder %s25, 0
      %s28 = sadd.s32 %s27, 1
      %s29 = scalar_select %p26, %s27, %s28
      %p32 = pneg %p26
      %p33 = scmp.eq.s32.totalorder %s17, 1
      %p34 = por %p32, %p33
      %p35 = scmp.ne.s32.totalorder %s27, %s30
      %p36 = scmp.eq.s32.totalorder %s17, 0
      %p37 = por %p35, %p36
      %p38 = scmp.ne.s32.totalorder %s27, %s30
      %p39 = scmp.eq.s32.totalorder %s22, 1
      %p40 = por %p38, %p39
      %p41 = scmp.ne.s32.totalorder %s30, %s31
      %p42 = scmp.eq.s32.totalorder %s22, 0
      %p43 = por %p41, %p42
      %p44 = scmp.ne.s32.totalorder %s30, %s31
      %p45 = scmp.eq.s32.totalorder %s23, 1
      %p46 = por %p44, %p45
      %p48 = scmp.ne.s32.totalorder %s31, %s47
      %p49 = scmp.eq.s32.totalorder %s23, 0
      %p50 = por %p48, %p49
      %s51 = ssub.s32 %s17, %s24
      %p52 = scmp.eq.s32.totalorder %s51, 0
      %s54 = sadd.s32 %s53, 1
      %s55 = scalar_select %p52, %s53, %s54
      %p58 = pneg %p52
      %p59 = scmp.eq.s32.totalorder %s17, 1
      %p60 = por %p58, %p59
      %p61 = scmp.ne.s32.totalorder %s53, %s56
      %p62 = scmp.eq.s32.totalorder %s17, 0
      %p63 = por %p61, %p62
      %p64 = scmp.ne.s32.totalorder %s53, %s56
      %p65 = scmp.eq.s32.totalorder %s22, 1
      %p66 = por %p64, %p65
      %p67 = scmp.ne.s32.totalorder %s56, %s57
      %p68 = scmp.eq.s32.totalorder %s22, 0
      %p69 = por %p67, %p68
      %p70 = scmp.ne.s32.totalorder %s56, %s57
      %p71 = scmp.eq.s32.totalorder %s23, 1
      %p72 = por %p70, %p71
      %p74 = scmp.ne.s32.totalorder %s57, %s73
      %p75 = scmp.eq.s32.totalorder %s23, 0
      %p76 = por %p74, %p75
      %s77 = ssub.s32 %s17, %s24
      %p78 = scmp.eq.s32.totalorder %s77, 0
      %s80 = sadd.s32 %s79, 1
      %s81 = scalar_select %p78, %s79, %s80
      %p84 = pneg %p78
      %p85 = scmp.eq.s32.totalorder %s17, 1
      %p86 = por %p84, %p85
      %p87 = scmp.ne.s32.totalorder %s79, %s82
      %p88 = scmp.eq.s32.totalorder %s17, 0
      %p89 = por %p87, %p88
      %p90 = scmp.ne.s32.totalorder %s79, %s82
      %p91 = scmp.eq.s32.totalorder %s22, 1
      %p92 = por %p90, %p91
      %p93 = scmp.ne.s32.totalorder %s82, %s83
      %p94 = scmp.eq.s32.totalorder %s22, 0
      %p95 = por %p93, %p94
      %p96 = scmp.ne.s32.totalorder %s82, %s83
      %p97 = scmp.eq.s32.totalorder %s23, 1
      %p98 = por %p96, %p97
      %p100 = scmp.ne.s32.totalorder %s83, %s99
      %p101 = scmp.eq.s32.totalorder %s23, 0
      %p102 = por %p100, %p101
      %p103 = scmp.le.s32.totalorder 1, %s17
      %p104 = scmp.lt.s32.totalorder %s17, 3
      %p105 = pnand %p103, %p104
      %p106 = pneg %p105
      // Predicated region
      $region9: #{tpu_custom_call.1} parent=5 // pred_check
        _
      $region10: #{tpu_custom_call.1} parent=5 // pred_check_branch
        %108 = sbr.rel (%p105) target = $region12
      $region11: #{tpu_custom_call.1} parent=5 // pred_region
        %s109 = ssub.s32 %s17, 1
      $region12: #{tpu_custom_call.1} parent=5 // pred_fallthru
        _
      %p110 = scmp.lt.s32.totalorder %s17, 2
      // Predicated region
      $region13: #{tpu_custom_call.1} parent=5 // pred_check
        %p111 = pneg %p110
      $region14: #{tpu_custom_call.1} parent=5 // pred_check_branch
        %113 = sbr.rel (%p111) target = $region16
      $region15: #{tpu_custom_call.1} parent=5 // pred_region
        // Predicated region
        $region17: #{tpu_custom_call.1} parent=15 // pred_check
          %p114 = pneg %p37
        $region18: #{tpu_custom_call.1} parent=15 // pred_check_branch
          %116 = sbr.rel (%p114) target = $region20
        $region19: #{tpu_custom_call.1} parent=15 // pred_region
          %s117 = sand.u32 %s27, 1
          %s118 = scalar_lea.sflag [#allocation3], %s117
          %s119 = sand.u32 %s27, 1
          %s120 = smul.addr %s119, 16
          %s121 = scalar_lea.vmem [#allocation2], %s120
          %s122 = smul.u32 2, %s17
          %s124 = ssub.s32 256, 256
          %125 = vsyncadd %s118, %s124
          %s126 = smul.addr %s122, 128
          %s127 = scalar_lea.hbm %s0, %s126
          %s128 = sshll.u32 %s121, 4
          %s129 = int_to_ptr.vmem [resolvable:$true] %s128
          %134 = dma.hbm_to_vmem [thread:$0]  %s127, 256, %s129, %s118, 128, 128, 8
        $region20: #{tpu_custom_call.1} parent=15 // pred_fallthru
          _
        // Predicated region
        $region21: #{tpu_custom_call.1} parent=15 // pred_check
          %p135 = pneg %p63
        $region22: #{tpu_custom_call.1} parent=15 // pred_check_branch
          %137 = sbr.rel (%p135) target = $region24
        $region23: #{tpu_custom_call.1} parent=15 // pred_region
          %s138 = sand.u32 %s53, 1
          %s139 = scalar_lea.sflag [#allocation6], %s138
          %s140 = sand.u32 %s53, 1
          %s141 = smul.addr %s140, 16
          %s142 = scalar_lea.vmem [#allocation5], %s141
          %s143 = smul.u32 2, %s17
          %s145 = ssub.s32 256, 256
          %146 = vsyncadd %s139, %s145
          %s147 = smul.addr %s143, 128
          %s148 = scalar_lea.hbm %s1, %s147
          %s149 = sshll.u32 %s142, 4
          %s150 = int_to_ptr.vmem [resolvable:$true] %s149
          %155 = dma.hbm_to_vmem [thread:$0]  %s148, 256, %s150, %s139, 128, 128, 8
        $region24: #{tpu_custom_call.1} parent=15 // pred_fallthru
          _
      $region16: #{tpu_custom_call.1} parent=5 // pred_fallthru
        _
      %p156 = scmp.le.s32.totalorder 1, %s17
      %p157 = scmp.lt.s32.totalorder %s17, 3
      %p158 = pnand %p156, %p157
      %p159 = pneg %p158
      // Predicated region
      $region25: #{tpu_custom_call.1} parent=5 // pred_check
        _
      $region26: #{tpu_custom_call.1} parent=5 // pred_check_branch
        %161 = sbr.rel (%p158) target = $region28
      $region27: #{tpu_custom_call.1} parent=5 // pred_region
        %s162 = ssub.s32 %s17, 1
        %s163 = sand.u32 %s30, 1
        %s164 = scalar_lea.sflag [#allocation3], %s163
        %s165 = sand.u32 %s30, 1
        %s166 = smul.addr %s165, 16
        %s167 = scalar_lea.vmem [#allocation2], %s166
        // Predicated region
        $region29: #{tpu_custom_call.1} parent=27 // pred_check
          %p168 = pneg %p43
        $region30: #{tpu_custom_call.1} parent=27 // pred_check_branch
          %170 = sbr.rel (%p168) target = $region32
        $region31: #{tpu_custom_call.1} parent=27 // pred_region
          %171 = dma.done %s164, 256
        $region32: #{tpu_custom_call.1} parent=27 // pred_fallthru
          _
        %s172 = sand.u32 %s56, 1
        %s173 = scalar_lea.sflag [#allocation6], %s172
        %s174 = sand.u32 %s56, 1
        %s175 = smul.addr %s174, 16
        %s176 = scalar_lea.vmem [#allocation5], %s175
        // Predicated region
        $region33: #{tpu_custom_call.1} parent=27 // pred_check
          %p177 = pneg %p69
        $region34: #{tpu_custom_call.1} parent=27 // pred_check_branch
          %179 = sbr.rel (%p177) target = $region36
        $region35: #{tpu_custom_call.1} parent=27 // pred_region
          %180 = dma.done %s173, 256
        $region36: #{tpu_custom_call.1} parent=27 // pred_fallthru
          _
        %s181 = sand.u32 %s30, 1
        %s182 = scalar_lea.sflag [#allocation3], %s181
        %s183 = sand.u32 %s30, 1
        %s184 = smul.addr %s183, 16
        %s185 = scalar_lea.vmem [#allocation2], %s184
        %p186 = pneg %p43
        %p187 = pneg %p40
        %s188 = sand.u32 %s56, 1
        %s189 = scalar_lea.sflag [#allocation6], %s188
        %s190 = sand.u32 %s56, 1
        %s191 = smul.addr %s190, 16
        %s192 = scalar_lea.vmem [#allocation5], %s191
        %p193 = pneg %p69
        %p194 = pneg %p66
        %p195 = pneg %p95
        %p196 = pneg %p92
        %s197 = sand.u32 %s82, 1
        %s198 = scalar_lea.sflag [#allocation4], %s197
        %s199 = sand.u32 %s82, 1
        %s200 = smul.addr %s199, 16
        %s201 = scalar_lea.vmem [#allocation7], %s200
        %s202 = smul.u32 2, %s22
        %s203 = smul.u32 2, %s22
        %s204 = smul.u32 2, %s22
        %v205 = vld [vmem:[%s167] sm:$0xff]
        %v206 = vld [vmem:[%s167 + $0x8] sm:$0xff]
        %v207 = vld [vmem:[%s176] sm:$0xff]
        %v208 = vld [vmem:[%s176 + $0x8] sm:$0xff]
        %v209 = vand.u32 2147483647, %v205
        %v210 = vand.u32 2147483647, %v206
        %v211 = vxor.u32 %v209, 2147483648
        %v212 = vxor.u32 %v210, 2147483648
        %v213 = vmul.f32 %v211, 1.442695
        %v214 = vpow.pop %v213
        %v215 = vmul.f32 %v212, 1.442695
        %v216 = vpow.pop %v215
        %v217 = vadd.f32 %v214, 1.0
        %v218 = vadd.f32 %v216, 1.0
        %v219 = vrcp.pop %v217
        %v220 = vmul.f32 1.0, %v219
        %v221 = vrcp.pop %v218
        %v222 = vmul.f32 1.0, %v221
        %vm223 = vcmp.ge.f32.partialorder %v205, 0.0
        %vm224 = vcmp.ge.f32.partialorder %v206, 0.0
        %v225 = vsub.f32 1.0, %v220
        %v226 = vsub.f32 1.0, %v222
        %v227 = vsel %vm223, %v220, %v225
        %v228 = vsel %vm224, %v222, %v226
        %v229 = vsub.f32 %v227, %v207
        %v230 = vsub.f32 %v228, %v208
        %v231 = vand.u32 2147483647, %v229
        %v232 = vand.u32 2147483647, %v230
        %v233 = vmul.f32 %v231, %v231
        %v234 = vmul.f32 %v232, %v232
        %vm235 = vcmp.gt.f32.partialorder %v207, 0.0
        %vm236 = vcmp.gt.f32.partialorder %v208, 0.0
        %v237 = vmul.f32 %v233, 0.75
        %v238 = vmul.f32 %v234, 0.75
        %v239 = vsel %vm235, %v207, %v237
        %v240 = vsel %vm236, %v208, %v238
        %v241 = vmax.f32 %v205, 0.0
        %v242 = vmax.f32 %v206, 0.0
        %v243 = vmul.f32 %v205, %v207
        %v244 = vmul.f32 %v206, %v208
        %v245 = vsub.f32 %v241, %v243
        %v246 = vsub.f32 %v242, %v244
        %v247 = vlog2.pop %v220
        %v248 = vmul.f32 %v247, 0.6931472
        %v249 = vlog2.pop %v222
        %v250 = vmul.f32 %v249, 0.6931472
        %v251 = vsub.f32 %v245, %v248
        %v252 = vsub.f32 %v246, %v250
        %v253 = vmul.f32 %v251, %v239
        %v254 = vmul.f32 %v252, %v240
        %255 = vst [vmem:[%s201] sm:$0xff] %v253
        %256 = vst [vmem:[%s201 + $0x8] sm:$0xff] %v254
        %s257 = sand.u32 %s82, 1
        %s258 = scalar_lea.sflag [#allocation4], %s257
        %s259 = sand.u32 %s82, 1
        %s260 = smul.addr %s259, 16
        %s261 = scalar_lea.vmem [#allocation7], %s260
        // Predicated region
        $region37: #{tpu_custom_call.1} parent=27 // pred_check
          %p262 = pneg %p92
        $region38: #{tpu_custom_call.1} parent=27 // pred_check_branch
          %264 = sbr.rel (%p262) target = $region40
        $region39: #{tpu_custom_call.1} parent=27 // pred_region
          %s265 = smul.u32 2, %s22
          %s267 = ssub.s32 256, 256
          %268 = vsyncadd %s258, %s267
          %s269 = smul.addr %s265, 128
          %s270 = scalar_lea.hbm %s2, %s269
          %s271 = sshll.u32 %s261, 4
          %s272 = int_to_ptr.vmem [resolvable:$true] %s271
          %277 = dma.vmem_to_hbm [thread:$0]  %s272, 256, %s270, %s258, 128, 128, 8
        $region40: #{tpu_custom_call.1} parent=27 // pred_fallthru
          _
      $region28: #{tpu_custom_call.1} parent=5 // pred_fallthru
        _
      %p278 = scmp.le.s32.totalorder 2, %s17
      // Predicated region
      $region41: #{tpu_custom_call.1} parent=5 // pred_check
        %p279 = pneg %p278
      $region42: #{tpu_custom_call.1} parent=5 // pred_check_branch
        %281 = sbr.rel (%p279) target = $region44
      $region43: #{tpu_custom_call.1} parent=5 // pred_region
        %s282 = ssub.s32 %s17, 2
        // Predicated region
        $region45: #{tpu_custom_call.1} parent=43 // pred_check
          %p283 = pneg %p98
        $region46: #{tpu_custom_call.1} parent=43 // pred_check_branch
          %285 = sbr.rel (%p283) target = $region48
        $region47: #{tpu_custom_call.1} parent=43 // pred_region
          %s286 = sand.u32 %s83, 1
          %s287 = scalar_lea.sflag [#allocation4], %s286
          %s288 = sand.u32 %s83, 1
          %s289 = smul.addr %s288, 16
          %s290 = scalar_lea.vmem [#allocation7], %s289
          %291 = dma.done %s287, 256
        $region48: #{tpu_custom_call.1} parent=43 // pred_fallthru
          _
      $region44: #{tpu_custom_call.1} parent=5 // pred_fallthru
        _
    $region6: #{tpu_custom_call.1} parent=1 // loop_footer
      %s21 = sadd.s32 1, %s17
    $region7: #{tpu_custom_call.1} parent=1 // loop_footer_branch
      %16 = sbr.rel target = $region3
    $region8: #{tpu_custom_call.1} parent=1 // loop_exit
      _
    %292 = vsyncpa [#allocation3], 1
    %s293 = scalar_lea.sflag [#allocation3], 1
    %294 = vsyncpa %s293, 1
    %295 = vsyncpa [#allocation6], 1
    %s296 = scalar_lea.sflag [#allocation6], 1
    %297 = vsyncpa %s296, 1
    %298 = vsyncpa [#allocation4], 1
    %s299 = scalar_lea.sflag [#allocation4], 1
    %300 = vsyncpa %s299, 1

</llo_original>
